<compile_context>
chip_gen: v5e
topology: v5e:2x2
jax: 0.10.0
libtpu: 0.0.40
codegen_flags: <defaults>
</compile_context>

<pallas_src>
import jax
import jax.numpy as jnp
from jax.experimental import pallas as pl
from jax.experimental.pallas import tpu as pltpu

INPUT_DIM = 1
OUTPUT_DIM = 1

_LANE = 128                  # lane width of a vreg
_TILE_ROWS = 8192            # 8192 * 128 * 4 B = 4 MiB per grid-step tile
_SINGLE_BLOCK_ROWS = 8192    # single resident block (no grid) up to 4 MiB in + 4 MiB out
_VMEM_LIMIT = 32 << 20       # >= 4x tile (double-buffered in + out); fits v5e/v6e/v7x


def _affine_kernel(w_ref, b_ref, x_ref, o_ref):
    # y = x * w + b : pure VPU broadcast multiply-add (K = N = 1, no MXU).
    # w_ref / b_ref are shape-(1,) f32 scalars living in SMEM.
    o_ref[...] = x_ref[...] * w_ref[0] + b_ref[0]


def _run_affine_2d(x2d, w_scalar, b_scalar):
    """Apply y = x*w + b to a lane-dense (rows, 128) f32 array via Pallas."""
    rows, lanes = x2d.shape
    cost = pl.CostEstimate(
        flops=2 * rows * lanes,
        transcendentals=0,
        bytes_accessed=8 * rows * lanes + 8,   # actual kernel HBM traffic (in + out)
    )
    smem = pl.BlockSpec(memory_space=pltpu.MemorySpace.SMEM)

    if rows <= _SINGLE_BLOCK_ROWS:
        # Single resident block: no grid, no pipeline prologue/epilogue, no per-step
        # overhead. Input + output resident = at most 8 MiB, under every VMEM budget.
        return pl.pallas_call(
            _affine_kernel,
            out_shape=jax.ShapeDtypeStruct((rows, lanes), jnp.float32),
            in_specs=[smem, smem, pl.BlockSpec(memory_space=pltpu.MemorySpace.VMEM)],
            out_specs=pl.BlockSpec(memory_space=pltpu.MemorySpace.VMEM),
            compiler_params=pltpu.CompilerParams(vmem_limit_bytes=_VMEM_LIMIT),
            cost_estimate=cost,
        )(w_scalar, b_scalar, x2d)

    # Large batch: 4 MiB tiles over a "parallel" grid axis (grid length >= 2 here,
    # so both v7x TensorCores get work). No over-padding to a whole tile: Pallas
    # masks the out-of-bounds tail of the partial last block.
    grid = (pl.cdiv(rows, _TILE_ROWS),)
    return pl.pallas_call(
        _affine_kernel,
        out_shape=jax.ShapeDtypeStruct((rows, lanes), jnp.float32),
        grid=grid,
        in_specs=[smem, smem, pl.BlockSpec((_TILE_ROWS, lanes), lambda i: (i, 0))],
        out_specs=pl.BlockSpec((_TILE_ROWS, lanes), lambda i: (i, 0)),
        compiler_params=pltpu.CompilerParams(
            dimension_semantics=("parallel",),
            vmem_limit_bytes=_VMEM_LIMIT,
        ),
        cost_estimate=cost,
    )(w_scalar, b_scalar, x2d)


def linear1x1_pallas(x, w_scalar, b_scalar):
    """y = x @ W^T + b for nn.Linear(1, 1), computed as a VPU multiply-add.

    x:        (M, 1) float32
    w_scalar: (1,)   float32
    b_scalar: (1,)   float32
    returns   (M, 1) float32
    """
    M, K = x.shape
    assert K == INPUT_DIM, "kernel is specialized for input_dim == 1"
    flat = x.reshape(-1).astype(jnp.float32)   # (M,) since K == 1 (free bitcast)

    rows = pl.cdiv(M, _LANE)
    padded = rows * _LANE

    if padded == M:
        # 128-aligned batch: reshape is a free bitcast -> zero extra HBM passes.
        out2d = _run_affine_2d(flat.reshape(rows, _LANE), w_scalar, b_scalar)
        return out2d.reshape(M, OUTPUT_DIM)

    # Ragged batch: pad only to the next multiple of 128 and slice the tail off.
    # TODO(synk): for large ragged batches prefer a 128-aligned M at the call site
    # (copy-free path above), or fuse the pad into the input DMA via allow_input_fusion.
    flat = jnp.pad(flat, (0, padded - M))
    out2d = _run_affine_2d(flat.reshape(rows, _LANE), w_scalar, b_scalar)
    return out2d.reshape(-1)[:M].reshape(M, OUTPUT_DIM)


class LinearRegressionModelPallas:
    """JAX/Pallas mirror of the PyTorch LinearRegressionModel (nn.Linear(1, 1))."""

    def __init__(self, input_dim, output_dim, key):
        assert input_dim == INPUT_DIM and output_dim == OUTPUT_DIM
        k_w, k_b = jax.random.split(key)
        bound = 1.0 / (input_dim ** 0.5)  # nn.Linear default init scale
        self.weight = jax.random.uniform(
            k_w, (output_dim, input_dim), jnp.float32, minval=-bound, maxval=bound
        )
        self.bias = jax.random.uniform(
            k_b, (output_dim,), jnp.float32, minval=-bound, maxval=bound
        )
        # Kernel-ready (1,) f32 SMEM scalars, prepared once (no per-call work).
        self.w_scalar = self.weight.reshape(-1).astype(jnp.float32)
        self.b_scalar = self.bias.reshape(-1).astype(jnp.float32)

    def __call__(self, x):
        return linear1x1_pallas(x, self.w_scalar, self.b_scalar)


if __name__ == "__main__":
    key = jax.random.PRNGKey(0)
    k_model, k_x1, k_x2 = jax.random.split(key, 3)

    model = LinearRegressionModelPallas(INPUT_DIM, OUTPUT_DIM, k_model)

    # Ragged small batch (exercises the minimal-pad path).
    x1 = jax.random.normal(k_x1, (8, INPUT_DIM), jnp.float32)
    out1 = model(x1)
    jax.block_until_ready(out1)
    ref1 = x1 @ model.weight.T + model.bias
    assert out1.shape == (8, OUTPUT_DIM)
    assert jnp.allclose(out1, ref1, atol=1e-5, rtol=1e-5)

    # 128-aligned batch (exercises the zero-copy single-block path).
    x2 = jax.random.normal(k_x2, (256, INPUT_DIM), jnp.float32)
    out2 = model(x2)
    jax.block_until_ready(out2)
    ref2 = x2 @ model.weight.T + model.bias
    assert out2.shape == (256, OUTPUT_DIM)
    assert jnp.allclose(out2, ref2, atol=1e-5, rtol=1e-5)

    print("KERNEL_OK")
</pallas_src>

<mosaic_0001>
module attributes {stable_mosaic.version = 11 : i64} {
  func.func @_affine_kernel(%arg0: memref<1xf32, #tpu.memory_space<smem>>, %arg1: memref<1xf32, #tpu.memory_space<smem>>, %arg2: memref<1x128xf32, #tpu.memory_space<vmem>>, %arg3: memref<1x128xf32, #tpu.memory_space<vmem>>) attributes {dimension_semantics = [], scalar_prefetch = 0 : i64, scratch_operands = 0 : i64, tpu.core_type = #tpu.core_type<tc>} {
    %c0 = arith.constant 0 : index
    %c0_0 = arith.constant 0 : index
    %0 = vector.load %arg2[%c0, %c0_0] : memref<1x128xf32, #tpu.memory_space<vmem>>, vector<1x128xf32>
    %c0_1 = arith.constant 0 : index
    %1 = memref.load %arg0[%c0_1] : memref<1xf32, #tpu.memory_space<smem>>
    %2 = vector.broadcast %1 : f32 to vector<1x128xf32>
    %3 = arith.mulf %0, %2 : vector<1x128xf32>
    %c0_2 = arith.constant 0 : index
    %4 = memref.load %arg1[%c0_2] : memref<1xf32, #tpu.memory_space<smem>>
    %5 = vector.broadcast %4 : f32 to vector<1x128xf32>
    %6 = arith.addf %3, %5 : vector<1x128xf32>
    %c0_3 = arith.constant 0 : index
    %c0_4 = arith.constant 0 : index
    %7 = vector.load %arg3[%c0_3, %c0_4] : memref<1x128xf32, #tpu.memory_space<vmem>>, vector<1x128xf32>
    tpu.vector_store %arg3[%c0_3, %c0_4], %6 {strides = array<i32>} : memref<1x128xf32, #tpu.memory_space<vmem>>, vector<1x128xf32>,
    return
  }
}

</mosaic_0001>

<llo_original>
// kernel: tpu_custom_call.1
$region0: #{tpu_custom_call.1}
  #allocation0 [shape = 'u32[]', space=smem, size = 0x4, offset = 0x4, fixed_abs, tag = 'smem constant byte address 0x4 - core index']
  #allocation1 [shape = 'u32[72,128]{1,0:T(1,128)}', space=vmem, size = 0x9000, scoped, tag = 'internal scratch']
  #allocation2 [shape = 'f32[1]{0:T(128)S(6)}', space=smem, size = 0x200, scoped, tag = 'scoped memory for tpu_custom_call.1']
  #allocation3 [shape = 'f32[1]{0:T(128)S(6)}', space=smem, size = 0x200, scoped, tag = 'scoped memory for tpu_custom_call.1']
  %s0 = inlined_call_operand.<no memory space> [shape: f32[1], index: 0, kind: input, shape index: {}]
  %s1 = inlined_call_operand.<no memory space> [shape: f32[1], index: 1, kind: input, shape index: {}]
  %s2 = inlined_call_operand.vmem [shape: f32[1,128], index: 2, kind: input, shape index: {}]
  %s3 = inlined_call_operand.hbm [shape: f32[1,128], index: 3, kind: output, shape index: {}]
  %s4 = sld [smem:[#allocation0]]
  $region22: #{tpu_custom_call.1} parent=0
    _
  %s6 = ssub.s32 1, %s4
  %s7 = scalar_select 0, %s6, %s4
  %8 = sst [smem:[#allocation2]] %s0
  %9 = sst [smem:[#allocation3]] %s1
  $region1: #{tpu_custom_call.1} parent=0
    #allocation4 [shape = 'u8[512]{0}', space=vmem, size = 0x400, scoped, tag = 'output window, operand 0, single buffered']
    #allocation5 [shape = 's32[1]{0}', space=sflag, size = 0x4, scoped, tag = 'scoped memory for tpu_custom_call.1']
    %10 = vsyncpa [#allocation5], 0
    // Predicated region
    $region2: #{tpu_custom_call.1} parent=1 // pred_check
      _
    $region3: #{tpu_custom_call.1} parent=1 // pred_check_branch
      %12 = sbr.rel (0) target = $region5
    $region4: #{tpu_custom_call.1} parent=1 // pred_region
      _
    $region5: #{tpu_custom_call.1} parent=1 // pred_fallthru
      _
    // Predicated region
    $region6: #{tpu_custom_call.1} parent=1 // pred_check
      _
    $region7: #{tpu_custom_call.1} parent=1 // pred_check_branch
      %14 = sbr.rel (0) target = $region9
    $region8: #{tpu_custom_call.1} parent=1 // pred_region
      _
    $region9: #{tpu_custom_call.1} parent=1 // pred_fallthru
      _
    // Predicated region
    $region10: #{tpu_custom_call.1} parent=1 // pred_check
      _
    $region11: #{tpu_custom_call.1} parent=1 // pred_check_branch
      %16 = sbr.rel (0) target = $region13
    $region12: #{tpu_custom_call.1} parent=1 // pred_region
      _
    $region13: #{tpu_custom_call.1} parent=1 // pred_fallthru
      _
    %v17 = vld [vmem:[%s2] sm:$0x1]
    %s18 = sld [smem:[#allocation2]]
    %v19 = vstv %s18
    %v20 = vmul.f32 %v17, %v19
    %s21 = sld [smem:[#allocation3]]
    %v22 = vstv %s21
    %v23 = vadd.f32 %v20, %v22
    %24 = vst [vmem:[#allocation4] sm:$0x1] %v23
    // Predicated region
    $region14: #{tpu_custom_call.1} parent=1 // pred_check
      _
    $region15: #{tpu_custom_call.1} parent=1 // pred_check_branch
      %26 = sbr.rel (0) target = $region17
    $region16: #{tpu_custom_call.1} parent=1 // pred_region
      %28 = vsyncadd [#allocation5], 0
      %s30 = sshll.u32 [#allocation4], 4
      %s31 = int_to_ptr.vmem [resolvable:$true] %s30
      %s32 = sshll.u32 %s3, 4
      %s33 = int_to_ptr.hbm [resolvable:$true] %s32
      %35 = dma.vmem_to_hbm [thread:$0]  %s31, 16, %s33, [#allocation5]
    $region17: #{tpu_custom_call.1} parent=1 // pred_fallthru
      _
    // Predicated region
    $region18: #{tpu_custom_call.1} parent=1 // pred_check
      _
    $region19: #{tpu_custom_call.1} parent=1 // pred_check_branch
      %37 = sbr.rel (0) target = $region21
    $region20: #{tpu_custom_call.1} parent=1 // pred_region
      %39 = dma.done [#allocation5], 16
    $region21: #{tpu_custom_call.1} parent=1 // pred_fallthru
      _
    %40 = vsyncpa [#allocation5], 1

</llo_original>
